<compile_context>
chip_gen: v7x
topology: tpu7x:2x2x1
jax: 0.10.0
libtpu: 0.0.40
codegen_flags: <defaults>
</compile_context>

<pallas_src>
import functools

import jax
import jax.numpy as jnp
import numpy as np
from jax.experimental import pallas as pl
from jax.experimental.pallas import tpu as pltpu


# ---------------------------------------------------------------------------
# Gabor filter construction (parameter setup -- plain JAX glue)
# ---------------------------------------------------------------------------
def gabor_kernel(a, w0, psi, ks):
    """a, w0: (order, nic, noc, 2); psi: (order, nic, noc) -> (order, nic, noc, ks, ks)."""
    i = jnp.arange(ks, dtype=jnp.float32)
    gy, gx = jnp.meshgrid(i, i, indexing="ij")        # torch.meshgrid default ('ij')
    x = jnp.stack([gy, gx], axis=2)                   # (ks, ks, 2)
    x0 = jnp.array([(ks - 1) / 2.0, (ks - 1) / 2.0], dtype=jnp.float32)
    d = x - x0                                        # (ks, ks, 2)
    a6 = a[:, :, :, None, None, :]
    w6 = w0[:, :, :, None, None, :]
    p5 = psi[:, :, :, None, None]
    return jnp.exp(-jnp.sum((a6 * d) ** 2, axis=-1)) * jnp.cos(
        jnp.sum(w6 * d, axis=-1) + p5)


def get_filter(alpha, a, w0, psi, ks, transpose=False):
    if transpose:
        w0, psi = -w0, -psi
    # (order, nic, noc, 1, 1) * (order, nic, noc, ks, ks) -> sum over order
    return (alpha * gabor_kernel(a, w0, psi, ks)).sum(axis=0)   # (nic, noc, ks, ks)


# ---------------------------------------------------------------------------
# Pallas kernel: the whole transposed conv as one lane-dense MXU matmul.
# ---------------------------------------------------------------------------
def _polyphase_matmul_kernel(w_ref, p_ref, o_ref):
    # w_ref: (M=noc*s*s, K=nic*Tw*Tw) polyphase weight matrix (VMEM resident)
    # p_ref: (K, Lt)  im2col patch tile; lane axis = flattened (n, qy, qx) pixels
    # o_ref: (M, Lt)  all output channels x sub-pixel phases for this pixel tile
    o_ref[...] = jnp.dot(
        w_ref[...], p_ref[...],
        preferred_element_type=jnp.float32,
        precision=jax.lax.Precision.HIGHEST,
    ).astype(o_ref.dtype)


def _pick_lane_tile(n_pixels):
    """Largest lane tile (multiple of 128) dividing the pixel axis, preferring
    >= 2 grid steps so the 'parallel' axis can shard across v7x's 2 TensorCores."""
    best = None
    for t in (8192, 4096, 2048, 1024, 512, 256, 128):
        if n_pixels % t == 0:
            if best is None:
                best = t
            if n_pixels // t >= 2:
                return t
    return best if best is not None else n_pixels


def conv_adjoint2d_gabor_forward(x, alpha, a, w0, psi, *, ks, stride):
    """Equivalent of ConvAdjoint2dGabor.forward. x: (N, nic, H, W) NCHW."""
    N, nic, H, W = x.shape
    noc = a.shape[2]
    s = stride
    p = (ks - 1) // 2

    # PyTorch ConvTranspose2d._output_padding for requested output (s*H, s*W)
    min_h = (H - 1) * s - 2 * p + ks
    op = s * H - min_h
    assert 0 <= op < s, "requested output size not reachable"

    # --- polyphase (sub-pixel) decomposition of conv_transpose2d -------------
    # y[n, co, s*qy+ry, s*qx+rx] = sum_{ci, d_y, d_x} x[n, ci, qy+d_y, qx+d_x]
    #                              * W[ci, co, ky, kx],  ky = ry + p - s*d_y
    # (taps with ky/kx outside [0, ks) contribute zero).
    d_min = -((ks - 1 - p) // s)          # == ceil((p - ks + 1) / s)
    d_max = (s - 1 + p) // s
    Tw = d_max - d_min + 1                # taps per axis in the phase window
    pad_lo = max(0, -d_min)
    pad_hi = max(0, d_max)
    ob = d_min + pad_lo                   # window start offset inside padded input

    # --- polyphase weight matrix: (noc*s*s, nic*Tw*Tw) ------------------------
    filt = get_filter(alpha, a, w0, psi, ks)            # (nic, noc, ks, ks), no flip
    kk = np.arange(s)[:, None] + p - s * (np.arange(Tw)[None, :] + d_min)   # (s, Tw)
    valid = (kk >= 0) & (kk < ks)
    kk_c = np.clip(kk, 0, ks - 1).reshape(-1)
    g = jnp.take(filt, jnp.asarray(kk_c), axis=2).reshape(nic, noc, s, Tw, ks)
    g = jnp.take(g, jnp.asarray(kk_c), axis=4).reshape(nic, noc, s, Tw, s, Tw)
    mask = jnp.asarray(valid[:, :, None, None] & valid[None, None, :, :], filt.dtype)
    g = g * mask[None, None]              # dims (ci, co, ry, u, rx, v)
    M, K = noc * s * s, nic * Tw * Tw
    w_mat = g.transpose(1, 2, 4, 0, 3, 5).reshape(M, K).astype(jnp.float32)

    # --- im2col patches: lane axis = flattened (n, qy, qx) pixels ------------
    x_pad = jnp.pad(x, ((0, 0), (0, 0), (pad_lo, pad_hi), (pad_lo, pad_hi)))
    wins = [x_pad[:, :, ob + u: ob + u + H, ob + v: ob + v + W]
            for u in range(Tw) for v in range(Tw)]       # each (N, nic, H, W)
    L = N * H * W
    patches = (jnp.stack(wins, axis=0).reshape(Tw, Tw, N, nic, H, W)
               .transpose(3, 0, 1, 2, 4, 5)              # (ci, u, v, n, qy, qx)
               .reshape(K, L).astype(jnp.float32))

    # --- Pallas: lane-dense MXU matmul, grid tiles the pixel (lane) axis -----
    lt = _pick_lane_tile(L)
    out_flat = pl.pallas_call(
        _polyphase_matmul_kernel,
        out_shape=jax.ShapeDtypeStruct((M, L), x.dtype),
        grid=(L // lt,),
        in_specs=[
            pl.BlockSpec((M, K), lambda j: (0, 0)),      # weights: resident block
            pl.BlockSpec((K, lt), lambda j: (0, j)),     # patch tile (lane-dense)
        ],
        out_specs=pl.BlockSpec((M, lt), lambda j: (0, j)),
        compiler_params=pltpu.CompilerParams(
            dimension_semantics=("parallel",)),          # v7x megacore sharding
    )(w_mat, patches)

    # --- interleave the s*s phases back into the (s*H, s*W) output -----------
    y = (out_flat.reshape(noc, s, s, N, H, W)            # (co, ry, rx, n, qy, qx)
         .transpose(3, 0, 4, 1, 5, 2)                    # (n, co, qy, ry, qx, rx)
         .reshape(N, noc, s * H, s * W))
    return y


if __name__ == "__main__":
    # Module config: ConvAdjoint2dGabor(nic=4, noc=4, ks=3, stride=2, order=2)
    nic, noc, ks, stride, order = 4, 4, 3, 2, 2
    N, H, W = 2, 16, 16

    key = jax.random.PRNGKey(0)
    k_alpha, k_a, k_w0, k_psi, k_x = jax.random.split(key, 5)
    alpha = jax.random.normal(k_alpha, (order, nic, noc, 1, 1), jnp.float32)
    a = jax.random.normal(k_a, (order, nic, noc, 2), jnp.float32)
    w0 = jax.random.normal(k_w0, (order, nic, noc, 2), jnp.float32)
    psi = jax.random.normal(k_psi, (order, nic, noc), jnp.float32)
    x = jax.random.normal(k_x, (N, nic, H, W), jnp.float32)

    fwd = jax.jit(functools.partial(conv_adjoint2d_gabor_forward, ks=ks, stride=stride))
    out = jax.block_until_ready(fwd(x, alpha, a, w0, psi))
    assert out.shape == (N, noc, stride * H, stride * W)

    # Reference: XLA transposed conv (same math as F.conv_transpose2d).
    p = (ks - 1) // 2
    op = stride * H - ((H - 1) * stride - 2 * p + ks)
    filt = get_filter(alpha, a, w0, psi, ks)
    ref = jax.lax.conv_general_dilated(
        x,
        jnp.transpose(filt[:, :, ::-1, ::-1], (1, 0, 2, 3)),   # OIHW, flipped
        window_strides=(1, 1),
        padding=[(ks - 1 - p, ks - 1 - p + op)] * 2,
        lhs_dilation=(stride, stride),
        dimension_numbers=("NCHW", "OIHW", "NCHW"),
        precision=jax.lax.Precision.HIGHEST,
    )
    # 1e-3 tolerance leaves headroom for MXU f32 pass-decomposition rounding;
    # any indexing/structural error would be O(1).
    np.testing.assert_allclose(np.asarray(out), np.asarray(ref), rtol=1e-3, atol=1e-3)

    print("KERNEL_OK")
</pallas_src>

<mosaic_0001>
module attributes {stable_mosaic.version = 11 : i64} {
  func.func @_polyphase_matmul_kernel(%arg0: i32, %arg1: memref<16x16xf32, #tpu.memory_space<vmem>>, %arg2: memref<16x256xf32, #tpu.memory_space<vmem>>, %arg3: memref<16x256xf32, #tpu.memory_space<vmem>>) attributes {dimension_semantics = [#tpu.dimension_semantics<parallel>], iteration_bounds = array<i64: 2>, scalar_prefetch = 0 : i64, scratch_operands = 0 : i64, tpu.core_type = #tpu.core_type<tc>, window_params = [{pipeline_mode = #tpu.pipeline_mode<synchronous>, transform_indices = @transform_0, window_bounds = array<i64: 16, 16>}, {transform_indices = @transform_1, window_bounds = array<i64: 16, 256>}, {transform_indices = @transform_2, window_bounds = array<i64: 16, 256>}]} {
    %c0 = arith.constant 0 : index
    %c0_0 = arith.constant 0 : index
    %0 = vector.load %arg1[%c0, %c0_0] : memref<16x16xf32, #tpu.memory_space<vmem>>, vector<16x16xf32>
    %c0_1 = arith.constant 0 : index
    %c0_2 = arith.constant 0 : index
    %1 = vector.load %arg2[%c0_1, %c0_2] : memref<16x256xf32, #tpu.memory_space<vmem>>, vector<16x256xf32>
    %cst = arith.constant dense<0.000000e+00> : vector<16x256xf32>
    %2 = tpu.matmul %0, %1, %cst {dimension_numbers = #tpu.dot_dimension_numbers<[1], [0], [0], [1], [0, 0, 1, 1], [], []>, precision = #tpu.contract_precision<fp32>} : vector<16x16xf32>, vector<16x256xf32>, vector<16x256xf32> -> vector<16x256xf32>
    %c0_3 = arith.constant 0 : index
    %c0_4 = arith.constant 0 : index
    %3 = vector.load %arg3[%c0_3, %c0_4] : memref<16x256xf32, #tpu.memory_space<vmem>>, vector<16x256xf32>
    tpu.vector_store %arg3[%c0_3, %c0_4], %2 {strides = array<i32>} : memref<16x256xf32, #tpu.memory_space<vmem>>, vector<16x256xf32>,
    return
  }
  func.func @transform_0(%arg0: i32) -> (i32, i32) {
    %c0_i32 = arith.constant 0 : i32
    %c0_i32_0 = arith.constant 0 : i32
    %c0_i32_1 = arith.constant 0 : i32
    return %c0_i32, %c0_i32_0 : i32, i32
  }
  func.func @transform_1(%arg0: i32) -> (i32, i32) {
    %c0_i32 = arith.constant 0 : i32
    %c0_i32_0 = arith.constant 0 : i32
    return %c0_i32, %arg0 : i32, i32
  }
  func.func @transform_2(%arg0: i32) -> (i32, i32) {
    %c0_i32 = arith.constant 0 : i32
    %c0_i32_0 = arith.constant 0 : i32
    return %c0_i32, %arg0 : i32, i32
  }
}

</mosaic_0001>

<llo_original>
// kernel: conv_adjoint2d_gabor_forward.1
$region0: #{conv_adjoint2d_gabor_forward.1}
  #allocation0 [shape = 'u32[]', space=smem, size = 0x4, offset = 0x4, fixed_abs, tag = 'smem constant byte address 0x4 - core index']
  #allocation1 [shape = 'u32[144,128]{1,0:T(1,128)}', space=vmem, size = 0x12000, scoped, tag = 'internal scratch']
  %s0 = inlined_call_operand.vmem [shape: f32[16,16], index: 0, kind: input, shape index: {}]
  %s1 = inlined_call_operand.vmem [shape: f32[16,512], index: 1, kind: input, shape index: {}]
  %s2 = inlined_call_operand.vmem [shape: f32[16,512], index: 2, kind: output, shape index: {}]
  %s3 = sld [smem:[#allocation0]]
  $region83: #{conv_adjoint2d_gabor_forward.1} parent=0
    _
  %s5 = ssub.s32 1, %s3
  %s6 = scalar_select 0, %s5, %s3
  $region1: #{conv_adjoint2d_gabor_forward.1} parent=0
    #allocation2 [shape = 'u8[32768]{0}', space=vmem, size = 0x8000, scoped, tag = 'input window, operand 1']
    #allocation3 [shape = 'u8[32768]{0}', space=vmem, size = 0x8000, scoped, tag = 'output window, operand 0']
    loop: start=0, step=1, limit=4
    $region2: #{conv_adjoint2d_gabor_forward.1} parent=1 // loop_pre_header
      _
    $region3: #{conv_adjoint2d_gabor_forward.1} parent=1 // loop_header
      %s8 = sphi 0, %s12
      %p9 = scmp.ge.s32.totalorder %s8, 4
      %s16 = sphi 0, %s16
      %s18 = sphi 0, %s16
      %s19 = sphi 0, %s18
      %s33 = sphi 0, %s19
      %s39 = sphi 0, %s41
      %s42 = sphi 0, %s39
      %s43 = sphi 0, %s42
      %s59 = sphi 0, %s43
      %s65 = sphi 0, %s67
      %s68 = sphi 0, %s65
      %s69 = sphi 0, %s68
      %s85 = sphi 0, %s69
    $region4: #{conv_adjoint2d_gabor_forward.1} parent=1 // loop_header_branch
      %11 = sbr.rel (%p9) target = $region8
    $region5: #{conv_adjoint2d_gabor_forward.1} parent=1 // loop_body
      %s13 = ssub.s32 %s8, 1
      %s14 = ssub.s32 %s8, 2
      %s15 = sadd.s32 %s8, 1
      %s17 = sadd.s32 %s16, 1
      %p20 = scmp.eq.s32.totalorder %s8, 1
      %p21 = scmp.ne.s32.totalorder %s16, %s18
      %p22 = scmp.eq.s32.totalorder %s8, 0
      %p23 = por %p21, %p22
      %p24 = scmp.ne.s32.totalorder %s16, %s18
      %p25 = scmp.eq.s32.totalorder %s13, 1
      %p26 = por %p24, %p25
      %p27 = scmp.ne.s32.totalorder %s18, %s19
      %p28 = scmp.eq.s32.totalorder %s13, 0
      %p29 = por %p27, %p28
      %p30 = scmp.ne.s32.totalorder %s18, %s19
      %p31 = scmp.eq.s32.totalorder %s14, 1
      %p32 = por %p30, %p31
      %p34 = scmp.ne.s32.totalorder %s19, %s33
      %p35 = scmp.eq.s32.totalorder %s14, 0
      %p36 = por %p34, %p35
      %s37 = ssub.s32 %s8, %s15
      %p38 = scmp.eq.s32.totalorder %s37, 0
      %s40 = sadd.s32 %s39, 1
      %s41 = scalar_select %p38, %s39, %s40
      %p44 = pneg %p38
      %p45 = scmp.eq.s32.totalorder %s8, 1
      %p46 = por %p44, %p45
      %p47 = scmp.ne.s32.totalorder %s39, %s42
      %p48 = scmp.eq.s32.totalorder %s8, 0
      %p49 = por %p47, %p48
      %p50 = scmp.ne.s32.totalorder %s39, %s42
      %p51 = scmp.eq.s32.totalorder %s13, 1
      %p52 = por %p50, %p51
      %p53 = scmp.ne.s32.totalorder %s42, %s43
      %p54 = scmp.eq.s32.totalorder %s13, 0
      %p55 = por %p53, %p54
      %p56 = scmp.ne.s32.totalorder %s42, %s43
      %p57 = scmp.eq.s32.totalorder %s14, 1
      %p58 = por %p56, %p57
      %p60 = scmp.ne.s32.totalorder %s43, %s59
      %p61 = scmp.eq.s32.totalorder %s14, 0
      %p62 = por %p60, %p61
      %s63 = ssub.s32 %s8, %s15
      %p64 = scmp.eq.s32.totalorder %s63, 0
      %s66 = sadd.s32 %s65, 1
      %s67 = scalar_select %p64, %s65, %s66
      %p70 = pneg %p64
      %p71 = scmp.eq.s32.totalorder %s8, 1
      %p72 = por %p70, %p71
      %p73 = scmp.ne.s32.totalorder %s65, %s68
      %p74 = scmp.eq.s32.totalorder %s8, 0
      %p75 = por %p73, %p74
      %p76 = scmp.ne.s32.totalorder %s65, %s68
      %p77 = scmp.eq.s32.totalorder %s13, 1
      %p78 = por %p76, %p77
      %p79 = scmp.ne.s32.totalorder %s68, %s69
      %p80 = scmp.eq.s32.totalorder %s13, 0
      %p81 = por %p79, %p80
      %p82 = scmp.ne.s32.totalorder %s68, %s69
      %p83 = scmp.eq.s32.totalorder %s14, 1
      %p84 = por %p82, %p83
      %p86 = scmp.ne.s32.totalorder %s69, %s85
      %p87 = scmp.eq.s32.totalorder %s14, 0
      %p88 = por %p86, %p87
      %p89 = scmp.le.s32.totalorder 1, %s8
      %p90 = scmp.lt.s32.totalorder %s8, 3
      %p91 = pnand %p89, %p90
      %p92 = pneg %p91
      // Predicated region
      $region9: #{conv_adjoint2d_gabor_forward.1} parent=5 // pred_check
        _
      $region10: #{conv_adjoint2d_gabor_forward.1} parent=5 // pred_check_branch
        %94 = sbr.rel (%p91) target = $region12
      $region11: #{conv_adjoint2d_gabor_forward.1} parent=5 // pred_region
        %s95 = ssub.s32 %s8, 1
        // Predicated region
        $region13: #{conv_adjoint2d_gabor_forward.1} parent=11 // pred_check
          %p96 = pneg %p29
        $region14: #{conv_adjoint2d_gabor_forward.1} parent=11 // pred_check_branch
          %98 = sbr.rel (%p96) target = $region16
        $region15: #{conv_adjoint2d_gabor_forward.1} parent=11 // pred_region
          _
        $region16: #{conv_adjoint2d_gabor_forward.1} parent=11 // pred_fallthru
          _
      $region12: #{conv_adjoint2d_gabor_forward.1} parent=5 // pred_fallthru
        _
      %p99 = scmp.lt.s32.totalorder %s8, 2
      // Predicated region
      $region17: #{conv_adjoint2d_gabor_forward.1} parent=5 // pred_check
        %p100 = pneg %p99
      $region18: #{conv_adjoint2d_gabor_forward.1} parent=5 // pred_check_branch
        %102 = sbr.rel (%p100) target = $region20
      $region19: #{conv_adjoint2d_gabor_forward.1} parent=5 // pred_region
        // Predicated region
        $region21: #{conv_adjoint2d_gabor_forward.1} parent=19 // pred_check
          %p103 = pneg %p49
        $region22: #{conv_adjoint2d_gabor_forward.1} parent=19 // pred_check_branch
          %105 = sbr.rel (%p103) target = $region24
        $region23: #{conv_adjoint2d_gabor_forward.1} parent=19 // pred_region
          %s106 = sand.u32 %s39, 1
          %s107 = sand.u32 %s39, 1
          %s108 = smul.addr %s107, 32
          %s109 = scalar_lea.vmem [#allocation2], %s108
          %s110 = smul.u32 2, %s8
          %s111 = smul.addr %s110, 8
          %s112 = scalar_lea.vmem %s1, %s111
          // Predicated region
          $region25: #{conv_adjoint2d_gabor_forward.1} parent=23 // pred_check
            _
          $region26: #{conv_adjoint2d_gabor_forward.1} parent=23 // pred_check_branch
            %114 = sbr.rel (0) target = $region28
          $region27: #{conv_adjoint2d_gabor_forward.1} parent=23 // pred_region
            // Predicated region
            $region29: #{conv_adjoint2d_gabor_forward.1} parent=27 // pred_check
              _
            $region30: #{conv_adjoint2d_gabor_forward.1} parent=27 // pred_check_branch
              %116 = sbr.rel (0) target = $region32
            $region31: #{conv_adjoint2d_gabor_forward.1} parent=27 // pred_region
              loop: start=0, step=1, limit=1
              $region33: #{conv_adjoint2d_gabor_forward.1} parent=31 // loop_pre_header
                _
              $region34: #{conv_adjoint2d_gabor_forward.1} parent=31 // loop_header
                %s118 = sphi 0, %s122
                %p119 = scmp.ge.s32.totalorder %s118, 1
                %s123 = sphi %s112, %s112
                %s124 = sphi %s109, %s109
              $region35: #{conv_adjoint2d_gabor_forward.1} parent=31 // loop_header_branch
                %121 = sbr.rel (%p119) target = $region39
              $region36: #{conv_adjoint2d_gabor_forward.1} parent=31 // loop_body
                %v125 = vld [vmem:[%s123] sm:$0xff]
                %126 = vst [vmem:[%s124] sm:$0xff] %v125
                %v127 = vld [vmem:[%s123 + $0x8] sm:$0xff]
                %128 = vst [vmem:[%s124 + $0x8] sm:$0xff] %v127
                %v129 = vld [vmem:[%s123 + $0x20] sm:$0xff]
                %130 = vst [vmem:[%s124 + $0x10] sm:$0xff] %v129
                %v131 = vld [vmem:[%s123 + $0x28] sm:$0xff]
                %132 = vst [vmem:[%s124 + $0x18] sm:$0xff] %v131
              $region37: #{conv_adjoint2d_gabor_forward.1} parent=31 // loop_footer
                %s122 = sadd.s32 1, %s118
              $region38: #{conv_adjoint2d_gabor_forward.1} parent=31 // loop_footer_branch
                %117 = sbr.rel target = $region34
              $region39: #{conv_adjoint2d_gabor_forward.1} parent=31 // loop_exit
                _
            $region32: #{conv_adjoint2d_gabor_forward.1} parent=27 // pred_fallthru
              _
            // Predicated region
            $region40: #{conv_adjoint2d_gabor_forward.1} parent=27 // pred_check
              _
            $region41: #{conv_adjoint2d_gabor_forward.1} parent=27 // pred_check_branch
              %134 = sbr.rel target = $region43
            $region42: #{conv_adjoint2d_gabor_forward.1} parent=27 // pred_region
              _
            $region43: #{conv_adjoint2d_gabor_forward.1} parent=27 // pred_fallthru
              _
          $region28: #{conv_adjoint2d_gabor_forward.1} parent=23 // pred_fallthru
            _
          %135 = vnop
        $region24: #{conv_adjoint2d_gabor_forward.1} parent=19 // pred_fallthru
          _
      $region20: #{conv_adjoint2d_gabor_forward.1} parent=5 // pred_fallthru
        _
      %p136 = scmp.le.s32.totalorder 1, %s8
      %p137 = scmp.lt.s32.totalorder %s8, 3
      %p138 = pnand %p136, %p137
      %p139 = pneg %p138
      // Predicated region
      $region44: #{conv_adjoint2d_gabor_forward.1} parent=5 // pred_check
        _
      $region45: #{conv_adjoint2d_gabor_forward.1} parent=5 // pred_check_branch
        %141 = sbr.rel (%p138) target = $region47
      $region46: #{conv_adjoint2d_gabor_forward.1} parent=5 // pred_region
        %s142 = ssub.s32 %s8, 1
        %s143 = sand.u32 %s42, 1
        %s144 = sand.u32 %s42, 1
        %s145 = smul.addr %s144, 32
        %s146 = scalar_lea.vmem [#allocation2], %s145
        // Predicated region
        $region48: #{conv_adjoint2d_gabor_forward.1} parent=46 // pred_check
          %p147 = pneg %p55
        $region49: #{conv_adjoint2d_gabor_forward.1} parent=46 // pred_check_branch
          %149 = sbr.rel (%p147) target = $region51
        $region50: #{conv_adjoint2d_gabor_forward.1} parent=46 // pred_region
          _
        $region51: #{conv_adjoint2d_gabor_forward.1} parent=46 // pred_fallthru
          _
        %p150 = pneg %p29
        %p151 = pneg %p26
        %s152 = sand.u32 %s42, 1
        %s153 = sand.u32 %s42, 1
        %s154 = smul.addr %s153, 32
        %s155 = scalar_lea.vmem [#allocation2], %s154
        %p156 = pneg %p55
        %p157 = pneg %p52
        %p158 = pneg %p81
        %p159 = pneg %p78
        %s160 = sand.u32 %s68, 1
        %s161 = sand.u32 %s68, 1
        %s162 = smul.addr %s161, 32
        %s163 = scalar_lea.vmem [#allocation3], %s162
        %s164 = smul.u32 2, %s13
        %s165 = smul.u32 2, %s13
        %v166 = vld [vmem:[%s0] sm:$0xff]
        %v167 = vld [vmem:[%s0 + $0x8] sm:$0xff]
        %v168 = vld [vmem:[%s146] sm:$0xff]
        %v169 = vld [vmem:[%s146 + $0x8] sm:$0xff]
        %v170 = vld [vmem:[%s146 + $0x10] sm:$0xff]
        %v171 = vld [vmem:[%s146 + $0x18] sm:$0xff]
        %vm172 = vcmask 130048
        %v174 = vsel %vm172, %v166, 0
        %v177 = vsel %vm172, %v167, 0
        %v179 = vand.u32 %v169, 4294901760
        %180 = vmatprep.subr.mxu0 %v179
        %v181 = vand.u32 %v168, 4294901760
        %182 = vmatpush1.msra.mxu0 %v181
        %v183 = vand.u32 %v171, 4294901760
        %184 = vmatprep.subr.mxu0 %v183
        %v185 = vand.u32 %v170, 4294901760
        %186 = vmatpush1.msra.mxu0 %v185
        %187 = vmatprep.subr.mxu0 0.0
        %188 = vmatpush1.msra.mxu0 0.0
        %189 = vmatprep.subr.mxu0 0.0
        %190 = vmatpush1.msra.mxu0 0.0
        %191 = vmatprep.subr.mxu0 0.0
        %192 = vmatpush1.msra.mxu0 0.0
        %193 = vmatprep.subr.mxu0 0.0
        %194 = vmatpush1.msra.mxu0 0.0
        %195 = vmatprep.subr.mxu0 0.0
        %196 = vmatpush1.msra.mxu0 0.0
        %197 = vmatprep.subr.mxu0 0.0
        %198 = vmatpush1.msra.mxu0 0.0
        %199 = vmatprep.subr.mxu0 0.0
        %200 = vmatpush1.msra.mxu0 0.0
        %201 = vmatprep.subr.mxu0 0.0
        %202 = vmatpush1.msra.mxu0 0.0
        %203 = vmatprep.subr.mxu0 0.0
        %204 = vmatpush1.msra.mxu0 0.0
        %205 = vmatprep.subr.mxu0 0.0
        %206 = vmatpush1.msra.mxu0 0.0
        %207 = vmatprep.subr.mxu0 0.0
        %208 = vmatpush1.msra.mxu0 0.0
        %209 = vmatprep.subr.mxu0 0.0
        %210 = vmatpush1.msra.mxu0 0.0
        %211 = vmatprep.subr.mxu0 0.0
        %212 = vmatpush1.msra.mxu0 0.0
        %213 = vmatprep.subr.mxu0 0.0
        %214 = vmatpush1.msra.mxu0 0.0
        %215 = vmatprep.subr.mxu0 0.0
        %216 = vmatpush1.msra.mxu0 0.0
        %217 = vmatprep.subr.mxu0 0.0
        %218 = vmatpush1.msra.mxu0 0.0
        %219 = vmatprep.subr.mxu0 0.0
        %220 = vmatpush1.msra.mxu0 0.0
        %221 = vmatprep.subr.mxu0 0.0
        %222 = vmatpush1.msra.mxu0 0.0
        %223 = vmatprep.subr.mxu0 0.0
        %224 = vmatpush1.msra.mxu0 0.0
        %225 = vmatprep.subr.mxu0 0.0
        %226 = vmatpush1.msra.mxu0 0.0
        %227 = vmatprep.subr.mxu0 0.0
        %228 = vmatpush1.msra.mxu0 0.0
        %229 = vmatprep.subr.mxu0 0.0
        %230 = vmatpush1.msra.mxu0 0.0
        %231 = vmatprep.subr.mxu0 0.0
        %232 = vmatpush1.msra.mxu0 0.0
        %233 = vmatprep.subr.mxu0 0.0
        %234 = vmatpush1.msra.mxu0 0.0
        %235 = vmatprep.subr.mxu0 0.0
        %236 = vmatpush1.msra.mxu0 0.0
        %237 = vmatprep.subr.mxu0 0.0
        %238 = vmatpush1.msra.mxu0 0.0
        %239 = vmatprep.subr.mxu0 0.0
        %240 = vmatpush1.msra.mxu0 0.0
        %241 = vmatprep.subr.mxu0 0.0
        %242 = vmatpush1.msra.mxu0 0.0
        %243 = vmatprep.subr.mxu0 0.0
        %244 = vmatpush1.msra.mxu0 0.0
        %245 = vmatprep.subr.mxu0 0.0
        %246 = vmatpush1.msra.mxu0 0.0
        %247 = vmatprep.mubr.f32.mxu0 0.0
        %v248 = vand.u32 %v174, 4294901760
        %v249 = vsub.f32 %v174, %v248
        %v250 = vand.u32 %v249, 4294901760
        %v251 = vsub.f32 %v249, %v250
        %v252 = vand.u32 %v251, 4294901760
        %253 = vmatmul.mubr.f32.gmra.mrb[0].mxu0 %v252
        %v254 = vpop.f32.mrb[0].mxu0
        %v255 = vadd.f32 0.0, %v254
        %v256 = vpop.f32.mrb[0].mxu0
        %v257 = vadd.f32 0.0, %v256
        %258 = vmatprep.mubr.f32.mxu0 0.0
        %v259 = vand.u32 %v177, 4294901760
        %v260 = vsub.f32 %v177, %v259
        %v261 = vand.u32 %v260, 4294901760
        %v262 = vsub.f32 %v260, %v261
        %v263 = vand.u32 %v262, 4294901760
        %264 = vmatmul.mubr.f32.gmra.mrb[0].mxu0 %v263
        %v265 = vpop.f32.mrb[0].mxu0
        %v266 = vadd.f32 0.0, %v265
        %v267 = vpop.f32.mrb[0].mxu0
        %v268 = vadd.f32 0.0, %v267
        %269 = vdwg.mxu0
        %v270 = vand.u32 %v169, 4294901760
        %v271 = vsub.f32 %v169, %v270
        %v272 = vand.u32 %v271, 4294901760
        %v273 = vsub.f32 %v271, %v272
        %v274 = vand.u32 %v273, 4294901760
        %275 = vmatprep.subr.mxu0 %v274
        %v276 = vand.u32 %v168, 4294901760
        %v277 = vsub.f32 %v168, %v276
        %v278 = vand.u32 %v277, 4294901760
        %v279 = vsub.f32 %v277, %v278
        %v280 = vand.u32 %v279, 4294901760
        %281 = vmatpush1.msra.mxu0 %v280
        %v282 = vand.u32 %v171, 4294901760
        %v283 = vsub.f32 %v171, %v282
        %v284 = vand.u32 %v283, 4294901760
        %v285 = vsub.f32 %v283, %v284
        %v286 = vand.u32 %v285, 4294901760
        %287 = vmatprep.subr.mxu0 %v286
        %v288 = vand.u32 %v170, 4294901760
        %v289 = vsub.f32 %v170, %v288
        %v290 = vand.u32 %v289, 4294901760
        %v291 = vsub.f32 %v289, %v290
        %v292 = vand.u32 %v291, 4294901760
        %293 = vmatpush1.msra.mxu0 %v292
        %294 = vmatprep.subr.mxu0 0.0
        %295 = vmatpush1.msra.mxu0 0.0
        %296 = vmatprep.subr.mxu0 0.0
        %297 = vmatpush1.msra.mxu0 0.0
        %298 = vmatprep.subr.mxu0 0.0
        %299 = vmatpush1.msra.mxu0 0.0
        %300 = vmatprep.subr.mxu0 0.0
        %301 = vmatpush1.msra.mxu0 0.0
        %302 = vmatprep.subr.mxu0 0.0
        %303 = vmatpush1.msra.mxu0 0.0
        %304 = vmatprep.subr.mxu0 0.0
        %305 = vmatpush1.msra.mxu0 0.0
        %306 = vmatprep.subr.mxu0 0.0
        %307 = vmatpush1.msra.mxu0 0.0
        %308 = vmatprep.subr.mxu0 0.0
        %309 = vmatpush1.msra.mxu0 0.0
        %310 = vmatprep.subr.mxu0 0.0
        %311 = vmatpush1.msra.mxu0 0.0
        %312 = vmatprep.subr.mxu0 0.0
        %313 = vmatpush1.msra.mxu0 0.0
        %314 = vmatprep.subr.mxu0 0.0
        %315 = vmatpush1.msra.mxu0 0.0
        %316 = vmatprep.subr.mxu0 0.0
        %317 = vmatpush1.msra.mxu0 0.0
        %318 = vmatprep.subr.mxu0 0.0
        %319 = vmatpush1.msra.mxu0 0.0
        %320 = vmatprep.subr.mxu0 0.0
        %321 = vmatpush1.msra.mxu0 0.0
        %322 = vmatprep.subr.mxu0 0.0
        %323 = vmatpush1.msra.mxu0 0.0
        %324 = vmatprep.subr.mxu0 0.0
        %325 = vmatpush1.msra.mxu0 0.0
        %326 = vmatprep.subr.mxu0 0.0
        %327 = vmatpush1.msra.mxu0 0.0
        %328 = vmatprep.subr.mxu0 0.0
        %329 = vmatpush1.msra.mxu0 0.0
        %330 = vmatprep.subr.mxu0 0.0
        %331 = vmatpush1.msra.mxu0 0.0
        %332 = vmatprep.subr.mxu0 0.0
        %333 = vmatpush1.msra.mxu0 0.0
        %334 = vmatprep.subr.mxu0 0.0
        %335 = vmatpush1.msra.mxu0 0.0
        %336 = vmatprep.subr.mxu0 0.0
        %337 = vmatpush1.msra.mxu0 0.0
        %338 = vmatprep.subr.mxu0 0.0
        %339 = vmatpush1.msra.mxu0 0.0
        %340 = vmatprep.subr.mxu0 0.0
        %341 = vmatpush1.msra.mxu0 0.0
        %342 = vmatprep.subr.mxu0 0.0
        %343 = vmatpush1.msra.mxu0 0.0
        %344 = vmatprep.subr.mxu0 0.0
        %345 = vmatpush1.msra.mxu0 0.0
        %346 = vmatprep.subr.mxu0 0.0
        %347 = vmatpush1.msra.mxu0 0.0
        %348 = vmatprep.subr.mxu0 0.0
        %349 = vmatpush1.msra.mxu0 0.0
        %350 = vmatprep.subr.mxu0 0.0
        %351 = vmatpush1.msra.mxu0 0.0
        %352 = vmatprep.subr.mxu0 0.0
        %353 = vmatpush1.msra.mxu0 0.0
        %354 = vmatprep.mubr.f32.mxu0 0.0
        %v355 = vand.u32 %v174, 4294901760
        %356 = vmatmul.mubr.f32.gmra.mrb[0].mxu0 %v355
        %v357 = vpop.f32.mrb[0].mxu0
        %v358 = vadd.f32 %v255, %v357
        %v359 = vpop.f32.mrb[0].mxu0
        %v360 = vadd.f32 %v257, %v359
        %361 = vmatprep.mubr.f32.mxu0 0.0
        %v362 = vand.u32 %v177, 4294901760
        %363 = vmatmul.mubr.f32.gmra.mrb[0].mxu0 %v362
        %v364 = vpop.f32.mrb[0].mxu0
        %v365 = vadd.f32 %v266, %v364
        %v366 = vpop.f32.mrb[0].mxu0
        %v367 = vadd.f32 %v268, %v366
        %368 = vdwg.mxu0
        %v369 = vand.u32 %v169, 4294901760
        %v370 = vsub.f32 %v169, %v369
        %371 = vmatprep.subr.mxu0 %v370
        %v372 = vand.u32 %v168, 4294901760
        %v373 = vsub.f32 %v168, %v372
        %374 = vmatpush1.msra.mxu0 %v373
        %v375 = vand.u32 %v171, 4294901760
        %v376 = vsub.f32 %v171, %v375
        %377 = vmatprep.subr.mxu0 %v376
        %v378 = vand.u32 %v170, 4294901760
        %v379 = vsub.f32 %v170, %v378
        %380 = vmatpush1.msra.mxu0 %v379
        %381 = vmatprep.subr.mxu0 0.0
        %382 = vmatpush1.msra.mxu0 0.0
        %383 = vmatprep.subr.mxu0 0.0
        %384 = vmatpush1.msra.mxu0 0.0
        %385 = vmatprep.subr.mxu0 0.0
        %386 = vmatpush1.msra.mxu0 0.0
        %387 = vmatprep.subr.mxu0 0.0
        %388 = vmatpush1.msra.mxu0 0.0
        %389 = vmatprep.subr.mxu0 0.0
        %390 = vmatpush1.msra.mxu0 0.0
        %391 = vmatprep.subr.mxu0 0.0
        %392 = vmatpush1.msra.mxu0 0.0
        %393 = vmatprep.subr.mxu0 0.0
        %394 = vmatpush1.msra.mxu0 0.0
        %395 = vmatprep.subr.mxu0 0.0
        %396 = vmatpush1.msra.mxu0 0.0
        %397 = vmatprep.subr.mxu0 0.0
        %398 = vmatpush1.msra.mxu0 0.0
        %399 = vmatprep.subr.mxu0 0.0
        %400 = vmatpush1.msra.mxu0 0.0
        %401 = vmatprep.subr.mxu0 0.0
        %402 = vmatpush1.msra.mxu0 0.0
        %403 = vmatprep.subr.mxu0 0.0
        %404 = vmatpush1.msra.mxu0 0.0
        %405 = vmatprep.subr.mxu0 0.0
        %406 = vmatpush1.msra.mxu0 0.0
        %407 = vmatprep.subr.mxu0 0.0
        %408 = vmatpush1.msra.mxu0 0.0
        %409 = vmatprep.subr.mxu0 0.0
        %410 = vmatpush1.msra.mxu0 0.0
        %411 = vmatprep.subr.mxu0 0.0
        %412 = vmatpush1.msra.mxu0 0.0
        %413 = vmatprep.subr.mxu0 0.0
        %414 = vmatpush1.msra.mxu0 0.0
        %415 = vmatprep.subr.mxu0 0.0
        %416 = vmatpush1.msra.mxu0 0.0
        %417 = vmatprep.subr.mxu0 0.0
        %418 = vmatpush1.msra.mxu0 0.0
        %419 = vmatprep.subr.mxu0 0.0
        %420 = vmatpush1.msra.mxu0 0.0
        %421 = vmatprep.subr.mxu0 0.0
        %422 = vmatpush1.msra.mxu0 0.0
        %423 = vmatprep.subr.mxu0 0.0
        %424 = vmatpush1.msra.mxu0 0.0
        %425 = vmatprep.subr.mxu0 0.0
        %426 = vmatpush1.msra.mxu0 0.0
        %427 = vmatprep.subr.mxu0 0.0
        %428 = vmatpush1.msra.mxu0 0.0
        %429 = vmatprep.subr.mxu0 0.0
        %430 = vmatpush1.msra.mxu0 0.0
        %431 = vmatprep.subr.mxu0 0.0
        %432 = vmatpush1.msra.mxu0 0.0
        %433 = vmatprep.subr.mxu0 0.0
        %434 = vmatpush1.msra.mxu0 0.0
        %435 = vmatprep.subr.mxu0 0.0
        %436 = vmatpush1.msra.mxu0 0.0
        %437 = vmatprep.subr.mxu0 0.0
        %438 = vmatpush1.msra.mxu0 0.0
        %439 = vmatprep.subr.mxu0 0.0
        %440 = vmatpush1.msra.mxu0 0.0
        %441 = vmatprep.mubr.f32.mxu0 0.0
        %v442 = vand.u32 %v174, 4294901760
        %v443 = vsub.f32 %v174, %v442
        %444 = vmatmul.mubr.f32.gmra.mrb[0].mxu0 %v443
        %v445 = vpop.f32.mrb[0].mxu0
        %v446 = vadd.f32 %v358, %v445
        %v447 = vpop.f32.mrb[0].mxu0
        %v448 = vadd.f32 %v360, %v447
        %449 = vmatprep.mubr.f32.mxu0 0.0
        %v450 = vand.u32 %v177, 4294901760
        %v451 = vsub.f32 %v177, %v450
        %452 = vmatmul.mubr.f32.gmra.mrb[0].mxu0 %v451
        %v453 = vpop.f32.mrb[0].mxu0
        %v454 = vadd.f32 %v365, %v453
        %v455 = vpop.f32.mrb[0].mxu0
        %v456 = vadd.f32 %v367, %v455
        %457 = vdwg.mxu0
        %v458 = vand.u32 %v169, 4294901760
        %459 = vmatprep.subr.mxu0 %v458
        %v460 = vand.u32 %v168, 4294901760
        %461 = vmatpush1.msra.mxu0 %v460
        %v462 = vand.u32 %v171, 4294901760
        %463 = vmatprep.subr.mxu0 %v462
        %v464 = vand.u32 %v170, 4294901760
        %465 = vmatpush1.msra.mxu0 %v464
        %466 = vmatprep.subr.mxu0 0.0
        %467 = vmatpush1.msra.mxu0 0.0
        %468 = vmatprep.subr.mxu0 0.0
        %469 = vmatpush1.msra.mxu0 0.0
        %470 = vmatprep.subr.mxu0 0.0
        %471 = vmatpush1.msra.mxu0 0.0
        %472 = vmatprep.subr.mxu0 0.0
        %473 = vmatpush1.msra.mxu0 0.0
        %474 = vmatprep.subr.mxu0 0.0
        %475 = vmatpush1.msra.mxu0 0.0
        %476 = vmatprep.subr.mxu0 0.0
        %477 = vmatpush1.msra.mxu0 0.0
        %478 = vmatprep.subr.mxu0 0.0
        %479 = vmatpush1.msra.mxu0 0.0
        %480 = vmatprep.subr.mxu0 0.0
        %481 = vmatpush1.msra.mxu0 0.0
        %482 = vmatprep.subr.mxu0 0.0
        %483 = vmatpush1.msra.mxu0 0.0
        %484 = vmatprep.subr.mxu0 0.0
        %485 = vmatpush1.msra.mxu0 0.0
        %486 = vmatprep.subr.mxu0 0.0
        %487 = vmatpush1.msra.mxu0 0.0
        %488 = vmatprep.subr.mxu0 0.0
        %489 = vmatpush1.msra.mxu0 0.0
        %490 = vmatprep.subr.mxu0 0.0
        %491 = vmatpush1.msra.mxu0 0.0
        %492 = vmatprep.subr.mxu0 0.0
        %493 = vmatpush1.msra.mxu0 0.0
        %494 = vmatprep.subr.mxu0 0.0
        %495 = vmatpush1.msra.mxu0 0.0
        %496 = vmatprep.subr.mxu0 0.0
        %497 = vmatpush1.msra.mxu0 0.0
        %498 = vmatprep.subr.mxu0 0.0
        %499 = vmatpush1.msra.mxu0 0.0
        %500 = vmatprep.subr.mxu0 0.0
        %501 = vmatpush1.msra.mxu0 0.0
        %502 = vmatprep.subr.mxu0 0.0
        %503 = vmatpush1.msra.mxu0 0.0
        %504 = vmatprep.subr.mxu0 0.0
        %505 = vmatpush1.msra.mxu0 0.0
        %506 = vmatprep.subr.mxu0 0.0
        %507 = vmatpush1.msra.mxu0 0.0
        %508 = vmatprep.subr.mxu0 0.0
        %509 = vmatpush1.msra.mxu0 0.0
        %510 = vmatprep.subr.mxu0 0.0
        %511 = vmatpush1.msra.mxu0 0.0
        %512 = vmatprep.subr.mxu0 0.0
        %513 = vmatpush1.msra.mxu0 0.0
        %514 = vmatprep.subr.mxu0 0.0
        %515 = vmatpush1.msra.mxu0 0.0
        %516 = vmatprep.subr.mxu0 0.0
        %517 = vmatpush1.msra.mxu0 0.0
        %518 = vmatprep.subr.mxu0 0.0
        %519 = vmatpush1.msra.mxu0 0.0
        %520 = vmatprep.subr.mxu0 0.0
        %521 = vmatpush1.msra.mxu0 0.0
        %522 = vmatprep.subr.mxu0 0.0
        %523 = vmatpush1.msra.mxu0 0.0
        %524 = vmatprep.subr.mxu0 0.0
        %525 = vmatpush1.msra.mxu0 0.0
        %526 = vmatprep.mubr.f32.mxu0 0.0
        %v527 = vand.u32 %v174, 4294901760
        %v528 = vsub.f32 %v174, %v527
        %v529 = vand.u32 %v528, 4294901760
        %530 = vmatmul.mubr.f32.gmra.mrb[0].mxu0 %v529
        %v531 = vpop.f32.mrb[0].mxu0
        %v532 = vadd.f32 %v446, %v531
        %v533 = vpop.f32.mrb[0].mxu0
        %v534 = vadd.f32 %v448, %v533
        %535 = vmatprep.mubr.f32.mxu0 0.0
        %v536 = vand.u32 %v177, 4294901760
        %v537 = vsub.f32 %v177, %v536
        %v538 = vand.u32 %v537, 4294901760
        %539 = vmatmul.mubr.f32.gmra.mrb[0].mxu0 %v538
        %v540 = vpop.f32.mrb[0].mxu0
        %v541 = vadd.f32 %v454, %v540
        %v542 = vpop.f32.mrb[0].mxu0
        %v543 = vadd.f32 %v456, %v542
        %544 = vdwg.mxu0
        %v545 = vand.u32 %v169, 4294901760
        %v546 = vsub.f32 %v169, %v545
        %v547 = vand.u32 %v546, 4294901760
        %548 = vmatprep.subr.mxu0 %v547
        %v549 = vand.u32 %v168, 4294901760
        %v550 = vsub.f32 %v168, %v549
        %v551 = vand.u32 %v550, 4294901760
        %552 = vmatpush1.msra.mxu0 %v551
        %v553 = vand.u32 %v171, 4294901760
        %v554 = vsub.f32 %v171, %v553
        %v555 = vand.u32 %v554, 4294901760
        %556 = vmatprep.subr.mxu0 %v555
        %v557 = vand.u32 %v170, 4294901760
        %v558 = vsub.f32 %v170, %v557
        %v559 = vand.u32 %v558, 4294901760
        %560 = vmatpush1.msra.mxu0 %v559
        %561 = vmatprep.subr.mxu0 0.0
        %562 = vmatpush1.msra.mxu0 0.0
        %563 = vmatprep.subr.mxu0 0.0
        %564 = vmatpush1.msra.mxu0 0.0
        %565 = vmatprep.subr.mxu0 0.0
        %566 = vmatpush1.msra.mxu0 0.0
        %567 = vmatprep.subr.mxu0 0.0
        %568 = vmatpush1.msra.mxu0 0.0
        %569 = vmatprep.subr.mxu0 0.0
        %570 = vmatpush1.msra.mxu0 0.0
        %571 = vmatprep.subr.mxu0 0.0
        %572 = vmatpush1.msra.mxu0 0.0
        %573 = vmatprep.subr.mxu0 0.0
        %574 = vmatpush1.msra.mxu0 0.0
        %575 = vmatprep.subr.mxu0 0.0
        %576 = vmatpush1.msra.mxu0 0.0
        %577 = vmatprep.subr.mxu0 0.0
        %578 = vmatpush1.msra.mxu0 0.0
        %579 = vmatprep.subr.mxu0 0.0
        %580 = vmatpush1.msra.mxu0 0.0
        %581 = vmatprep.subr.mxu0 0.0
        %582 = vmatpush1.msra.mxu0 0.0
        %583 = vmatprep.subr.mxu0 0.0
        %584 = vmatpush1.msra.mxu0 0.0
        %585 = vmatprep.subr.mxu0 0.0
        %586 = vmatpush1.msra.mxu0 0.0
        %587 = vmatprep.subr.mxu0 0.0
        %588 = vmatpush1.msra.mxu0 0.0
        %589 = vmatprep.subr.mxu0 0.0
        %590 = vmatpush1.msra.mxu0 0.0
        %591 = vmatprep.subr.mxu0 0.0
        %592 = vmatpush1.msra.mxu0 0.0
        %593 = vmatprep.subr.mxu0 0.0
        %594 = vmatpush1.msra.mxu0 0.0
        %595 = vmatprep.subr.mxu0 0.0
        %596 = vmatpush1.msra.mxu0 0.0
        %597 = vmatprep.subr.mxu0 0.0
        %598 = vmatpush1.msra.mxu0 0.0
        %599 = vmatprep.subr.mxu0 0.0
        %600 = vmatpush1.msra.mxu0 0.0
        %601 = vmatprep.subr.mxu0 0.0
        %602 = vmatpush1.msra.mxu0 0.0
        %603 = vmatprep.subr.mxu0 0.0
        %604 = vmatpush1.msra.mxu0 0.0
        %605 = vmatprep.subr.mxu0 0.0
        %606 = vmatpush1.msra.mxu0 0.0
        %607 = vmatprep.subr.mxu0 0.0
        %608 = vmatpush1.msra.mxu0 0.0
        %609 = vmatprep.subr.mxu0 0.0
        %610 = vmatpush1.msra.mxu0 0.0
        %611 = vmatprep.subr.mxu0 0.0
        %612 = vmatpush1.msra.mxu0 0.0
        %613 = vmatprep.subr.mxu0 0.0
        %614 = vmatpush1.msra.mxu0 0.0
        %615 = vmatprep.subr.mxu0 0.0
        %616 = vmatpush1.msra.mxu0 0.0
        %617 = vmatprep.subr.mxu0 0.0
        %618 = vmatpush1.msra.mxu0 0.0
        %619 = vmatprep.subr.mxu0 0.0
        %620 = vmatpush1.msra.mxu0 0.0
        %621 = vmatprep.mubr.f32.mxu0 0.0
        %v622 = vand.u32 %v174, 4294901760
        %623 = vmatmul.mubr.f32.gmra.mrb[0].mxu0 %v622
        %v624 = vpop.f32.mrb[0].mxu0
        %v625 = vadd.f32 %v532, %v624
        %v626 = vpop.f32.mrb[0].mxu0
        %v627 = vadd.f32 %v534, %v626
        %628 = vmatprep.mubr.f32.mxu0 0.0
        %v629 = vand.u32 %v177, 4294901760
        %630 = vmatmul.mubr.f32.gmra.mrb[0].mxu0 %v629
        %v631 = vpop.f32.mrb[0].mxu0
        %v632 = vadd.f32 %v541, %v631
        %v633 = vpop.f32.mrb[0].mxu0
        %v634 = vadd.f32 %v543, %v633
        %635 = vdwg.mxu0
        %v636 = vand.u32 %v169, 4294901760
        %637 = vmatprep.subr.mxu0 %v636
        %v638 = vand.u32 %v168, 4294901760
        %639 = vmatpush1.msra.mxu0 %v638
        %v640 = vand.u32 %v171, 4294901760
        %641 = vmatprep.subr.mxu0 %v640
        %v642 = vand.u32 %v170, 4294901760
        %643 = vmatpush1.msra.mxu0 %v642
        %644 = vmatprep.subr.mxu0 0.0
        %645 = vmatpush1.msra.mxu0 0.0
        %646 = vmatprep.subr.mxu0 0.0
        %647 = vmatpush1.msra.mxu0 0.0
        %648 = vmatprep.subr.mxu0 0.0
        %649 = vmatpush1.msra.mxu0 0.0
        %650 = vmatprep.subr.mxu0 0.0
        %651 = vmatpush1.msra.mxu0 0.0
        %652 = vmatprep.subr.mxu0 0.0
        %653 = vmatpush1.msra.mxu0 0.0
        %654 = vmatprep.subr.mxu0 0.0
        %655 = vmatpush1.msra.mxu0 0.0
        %656 = vmatprep.subr.mxu0 0.0
        %657 = vmatpush1.msra.mxu0 0.0
        %658 = vmatprep.subr.mxu0 0.0
        %659 = vmatpush1.msra.mxu0 0.0
        %660 = vmatprep.subr.mxu0 0.0
        %661 = vmatpush1.msra.mxu0 0.0
        %662 = vmatprep.subr.mxu0 0.0
        %663 = vmatpush1.msra.mxu0 0.0
        %664 = vmatprep.subr.mxu0 0.0
        %665 = vmatpush1.msra.mxu0 0.0
        %666 = vmatprep.subr.mxu0 0.0
        %667 = vmatpush1.msra.mxu0 0.0
        %668 = vmatprep.subr.mxu0 0.0
        %669 = vmatpush1.msra.mxu0 0.0
        %670 = vmatprep.subr.mxu0 0.0
        %671 = vmatpush1.msra.mxu0 0.0
        %672 = vmatprep.subr.mxu0 0.0
        %673 = vmatpush1.msra.mxu0 0.0
        %674 = vmatprep.subr.mxu0 0.0
        %675 = vmatpush1.msra.mxu0 0.0
        %676 = vmatprep.subr.mxu0 0.0
        %677 = vmatpush1.msra.mxu0 0.0
        %678 = vmatprep.subr.mxu0 0.0
        %679 = vmatpush1.msra.mxu0 0.0
        %680 = vmatprep.subr.mxu0 0.0
        %681 = vmatpush1.msra.mxu0 0.0
        %682 = vmatprep.subr.mxu0 0.0
        %683 = vmatpush1.msra.mxu0 0.0
        %684 = vmatprep.subr.mxu0 0.0
        %685 = vmatpush1.msra.mxu0 0.0
        %686 = vmatprep.subr.mxu0 0.0
        %687 = vmatpush1.msra.mxu0 0.0
        %688 = vmatprep.subr.mxu0 0.0
        %689 = vmatpush1.msra.mxu0 0.0
        %690 = vmatprep.subr.mxu0 0.0
        %691 = vmatpush1.msra.mxu0 0.0
        %692 = vmatprep.subr.mxu0 0.0
        %693 = vmatpush1.msra.mxu0 0.0
        %694 = vmatprep.subr.mxu0 0.0
        %695 = vmatpush1.msra.mxu0 0.0
        %696 = vmatprep.subr.mxu0 0.0
        %697 = vmatpush1.msra.mxu0 0.0
        %698 = vmatprep.subr.mxu0 0.0
        %699 = vmatpush1.msra.mxu0 0.0
        %700 = vmatprep.subr.mxu0 0.0
        %701 = vmatpush1.msra.mxu0 0.0
        %702 = vmatprep.subr.mxu0 0.0
        %703 = vmatpush1.msra.mxu0 0.0
        %704 = vmatprep.mubr.f32.mxu0 0.0
        %v705 = vand.u32 %v174, 4294901760
        %706 = vmatmul.mubr.f32.gmra.mrb[0].mxu0 %v705
        %v707 = vpop.f32.mrb[0].mxu0
        %v708 = vadd.f32 %v625, %v707
        %v709 = vpop.f32.mrb[0].mxu0
        %v710 = vadd.f32 %v627, %v709
        %711 = vmatprep.mubr.f32.mxu0 0.0
        %v712 = vand.u32 %v177, 4294901760
        %713 = vmatmul.mubr.f32.gmra.mrb[0].mxu0 %v712
        %v714 = vpop.f32.mrb[0].mxu0
        %v715 = vadd.f32 %v632, %v714
        %v716 = vpop.f32.mrb[0].mxu0
        %v717 = vadd.f32 %v634, %v716
        %718 = vdwg.mxu0
        %719 = vst [vmem:[%s163] sm:$0xff] %v708
        %720 = vst [vmem:[%s163 + $0x8] sm:$0xff] %v710
        %721 = vst [vmem:[%s163 + $0x10] sm:$0xff] %v715
        %722 = vst [vmem:[%s163 + $0x18] sm:$0xff] %v717
        %s723 = sand.u32 %s68, 1
        %s724 = sand.u32 %s68, 1
        %s725 = smul.addr %s724, 32
        %s726 = scalar_lea.vmem [#allocation3], %s725
        // Predicated region
        $region52: #{conv_adjoint2d_gabor_forward.1} parent=46 // pred_check
          %p727 = pneg %p78
        $region53: #{conv_adjoint2d_gabor_forward.1} parent=46 // pred_check_branch
          %729 = sbr.rel (%p727) target = $region55
        $region54: #{conv_adjoint2d_gabor_forward.1} parent=46 // pred_region
          %s730 = smul.u32 2, %s13
          %s731 = smul.addr %s730, 8
          %s732 = scalar_lea.vmem %s2, %s731
          // Predicated region
          $region56: #{conv_adjoint2d_gabor_forward.1} parent=54 // pred_check
            _
          $region57: #{conv_adjoint2d_gabor_forward.1} parent=54 // pred_check_branch
            %734 = sbr.rel (0) target = $region59
          $region58: #{conv_adjoint2d_gabor_forward.1} parent=54 // pred_region
            // Predicated region
            $region60: #{conv_adjoint2d_gabor_forward.1} parent=58 // pred_check
              _
            $region61: #{conv_adjoint2d_gabor_forward.1} parent=58 // pred_check_branch
              %736 = sbr.rel (0) target = $region63
            $region62: #{conv_adjoint2d_gabor_forward.1} parent=58 // pred_region
              loop: start=0, step=1, limit=1
              $region64: #{conv_adjoint2d_gabor_forward.1} parent=62 // loop_pre_header
                _
              $region65: #{conv_adjoint2d_gabor_forward.1} parent=62 // loop_header
                %s738 = sphi 0, %s742
                %p739 = scmp.ge.s32.totalorder %s738, 1
                %s743 = sphi %s726, %s726
                %s744 = sphi %s732, %s732
              $region66: #{conv_adjoint2d_gabor_forward.1} parent=62 // loop_header_branch
                %741 = sbr.rel (%p739) target = $region70
              $region67: #{conv_adjoint2d_gabor_forward.1} parent=62 // loop_body
                %v745 = vld [vmem:[%s743] sm:$0xff]
                %746 = vst [vmem:[%s744] sm:$0xff] %v745
                %v747 = vld [vmem:[%s743 + $0x8] sm:$0xff]
                %748 = vst [vmem:[%s744 + $0x8] sm:$0xff] %v747
                %v749 = vld [vmem:[%s743 + $0x10] sm:$0xff]
                %750 = vst [vmem:[%s744 + $0x20] sm:$0xff] %v749
                %v751 = vld [vmem:[%s743 + $0x18] sm:$0xff]
                %752 = vst [vmem:[%s744 + $0x28] sm:$0xff] %v751
              $region68: #{conv_adjoint2d_gabor_forward.1} parent=62 // loop_footer
                %s742 = sadd.s32 1, %s738
              $region69: #{conv_adjoint2d_gabor_forward.1} parent=62 // loop_footer_branch
                %737 = sbr.rel target = $region65
              $region70: #{conv_adjoint2d_gabor_forward.1} parent=62 // loop_exit
                _
            $region63: #{conv_adjoint2d_gabor_forward.1} parent=58 // pred_fallthru
              _
            // Predicated region
            $region71: #{conv_adjoint2d_gabor_forward.1} parent=58 // pred_check
              _
            $region72: #{conv_adjoint2d_gabor_forward.1} parent=58 // pred_check_branch
              %754 = sbr.rel target = $region74
            $region73: #{conv_adjoint2d_gabor_forward.1} parent=58 // pred_region
              _
            $region74: #{conv_adjoint2d_gabor_forward.1} parent=58 // pred_fallthru
              _
          $region59: #{conv_adjoint2d_gabor_forward.1} parent=54 // pred_fallthru
            _
          %755 = vnop
        $region55: #{conv_adjoint2d_gabor_forward.1} parent=46 // pred_fallthru
          _
      $region47: #{conv_adjoint2d_gabor_forward.1} parent=5 // pred_fallthru
        _
      %p756 = scmp.le.s32.totalorder 2, %s8
      // Predicated region
      $region75: #{conv_adjoint2d_gabor_forward.1} parent=5 // pred_check
        %p757 = pneg %p756
      $region76: #{conv_adjoint2d_gabor_forward.1} parent=5 // pred_check_branch
        %759 = sbr.rel (%p757) target = $region78
      $region77: #{conv_adjoint2d_gabor_forward.1} parent=5 // pred_region
        %s760 = ssub.s32 %s8, 2
        // Predicated region
        $region79: #{conv_adjoint2d_gabor_forward.1} parent=77 // pred_check
          %p761 = pneg %p84
        $region80: #{conv_adjoint2d_gabor_forward.1} parent=77 // pred_check_branch
          %763 = sbr.rel (%p761) target = $region82
        $region81: #{conv_adjoint2d_gabor_forward.1} parent=77 // pred_region
          %s764 = sand.u32 %s69, 1
          %s765 = sand.u32 %s69, 1
          %s766 = smul.addr %s765, 32
          %s767 = scalar_lea.vmem [#allocation3], %s766
        $region82: #{conv_adjoint2d_gabor_forward.1} parent=77 // pred_fallthru
          _
      $region78: #{conv_adjoint2d_gabor_forward.1} parent=5 // pred_fallthru
        _
    $region6: #{conv_adjoint2d_gabor_forward.1} parent=1 // loop_footer
      %s12 = sadd.s32 1, %s8
    $region7: #{conv_adjoint2d_gabor_forward.1} parent=1 // loop_footer_branch
      %7 = sbr.rel target = $region3
    $region8: #{conv_adjoint2d_gabor_forward.1} parent=1 // loop_exit
      _

</llo_original>
